<compile_context>
chip_gen: v6e
topology: v6e:2x2x1
jax: 0.10.0
libtpu: 0.0.40
codegen_flags: <defaults>
</compile_context>

<pallas_src>
import functools

import jax
import jax.numpy as jnp
from jax import lax
from jax.experimental import pallas as pl
from jax.experimental.pallas import tpu as pltpu


def _round_up(x, m):
    return (x + m - 1) // m * m


def _vmem_capacity_bytes():
    try:
        return int(pltpu.get_tpu_info().vmem_capacity_bytes)
    except Exception:
        return 64 * 1024 * 1024   # conservative fallback (v7x per-TC VMEM)


def highway_kernel(x_ref, w_ref, b_ref, o_ref, *, hidden_pad, num_layers,
                   approx_sigmoid):
    """One row-tile grid step; runs all highway layers in-kernel.

    x_ref : (tm, Dp)        input rows
    w_ref : (L, Dp, 2*Dp)   fused [Wt | Wg] per layer, (in, out) layout
    b_ref : (L, 1, 2*Dp)    fused [bt | bg] per layer (f32)
    o_ref : (tm, Dp)        output rows
    """
    Dp = hidden_pad
    x0 = x_ref[...].astype(jnp.float32)          # f32 carry (residual path)

    def layer(l, x):
        x_mxu = x.astype(w_ref.dtype)            # bf16 MXU inputs if weights bf16
        z = jnp.dot(x_mxu, w_ref[l], preferred_element_type=jnp.float32)
        z = z + b_ref[l]
        h = jnp.maximum(z[:, :Dp], 0.0)          # transform half (relu)
        zg = z[:, Dp:]                           # gate half
        if approx_sigmoid:
            # exp and reciprocal both on the EUP slot; frees VALU for the blend.
            t = pl.reciprocal(1.0 + jnp.exp(-zg), approx=True)
        else:
            t = jax.nn.sigmoid(zg)
        return x + t * (h - x)                   # == h*t + x*(1-t)

    x_out = lax.fori_loop(0, num_layers, layer, x0, unroll=True)
    o_ref[...] = x_out.astype(o_ref.dtype)


def prepare_highway_params(wt, bt, wg, bg, *, mxu_dtype=None):
    """One-time parameter prep (transpose, pad to 128 lanes, fuse, cast).

    wt/wg: [L, D, D] in PyTorch (out, in) layout; bt/bg: [L, D].
    Returns w_cat: [L, Dp, 2*Dp], b_cat: [L, 1, 2*Dp]  with Dp = round_up(D, 128).
    Zero-padding is exact for highway: padded output columns get h=0, t=0.5,
    x_new = 0 + 0.5*(0-0) = 0, so padded lanes stay zero across layers.
    """
    L, D, _ = wt.shape
    Dp = _round_up(max(D, 128), 128)

    pad_w = ((0, 0), (0, Dp - D), (0, Dp - D))
    wt_t = jnp.pad(jnp.transpose(wt, (0, 2, 1)), pad_w)    # (out,in) -> (in,out)
    wg_t = jnp.pad(jnp.transpose(wg, (0, 2, 1)), pad_w)
    w_cat = jnp.concatenate([wt_t, wg_t], axis=-1)          # (L, Dp, 2*Dp)
    if mxu_dtype is not None:   # e.g. jnp.bfloat16: MXU peak + half weight DMA
        w_cat = w_cat.astype(mxu_dtype)

    pad_b = ((0, 0), (0, Dp - D))
    bt_p = jnp.pad(bt.astype(jnp.float32), pad_b)
    bg_p = jnp.pad(bg.astype(jnp.float32), pad_b)
    b_cat = jnp.concatenate([bt_p, bg_p], axis=-1).reshape(L, 1, 2 * Dp)
    return w_cat, b_cat


def highway_forward(x, w_cat, b_cat, *, tm=512, approx_sigmoid=True):
    """x: [B, S, D]; (w_cat, b_cat) from prepare_highway_params."""
    B, S, D = x.shape
    L, Dp, Dp2 = w_cat.shape
    assert Dp2 == 2 * Dp and Dp % 128 == 0 and Dp >= D
    M = B * S

    xb = x.dtype.itemsize
    wb = w_cat.dtype.itemsize

    vmem_cap = _vmem_capacity_bytes()
    vmem_budget = int(0.8 * vmem_cap)            # headroom for Mosaic scratch

    def vmem_est(tm_):
        return (4 * tm_ * Dp * xb                # x + out tiles, double-buffered
                + 2 * L * Dp * 2 * Dp * wb       # resident fused weight stack
                + 2 * L * 2 * Dp * 4             # fused biases
                + 4 * tm_ * Dp * 4)              # f32 carry + (tm, 2*Dp) working set

    assert tm % 8 == 0, "row tile must be a sublane multiple"
    tm = min(tm, _round_up(M, 8))                # don't over-pad tiny inputs
    while tm > 8 and vmem_est(tm) > vmem_budget:
        tm = max(8, (tm // 2) // 8 * 8)
    # TODO(synk): if the resident (L, Dp, 2*Dp) weight stack alone exceeds the
    # VMEM budget (very large D), add a K-tiling grid axis instead of shrinking tm.

    M_pad = _round_up(M, tm)
    x2d = x.reshape(M, D)
    if M_pad != M or Dp != D:                    # pad rows + lanes (zeros)
        x2d = jnp.pad(x2d, ((0, M_pad - M), (0, Dp - D)))

    grid = (M_pad // tm,)                        # on v7x: >=2 row tiles feeds both TCs

    cost = pl.CostEstimate(
        flops=2 * M_pad * Dp * 2 * Dp * L,                   # one fused matmul/layer
        transcendentals=M_pad * Dp * L,                      # exp (sigmoid)
        bytes_accessed=(2 * M_pad * Dp * xb                  # x in + out
                        + L * Dp * 2 * Dp * wb               # weights, DMA'd once
                        + L * 2 * Dp * 4))                   # biases

    vmem_limit = int(min(max(2 * vmem_est(tm), 32 * 1024 * 1024), vmem_budget))

    kernel = functools.partial(highway_kernel, hidden_pad=Dp, num_layers=L,
                               approx_sigmoid=approx_sigmoid)

    out2d = pl.pallas_call(
        kernel,
        out_shape=jax.ShapeDtypeStruct((M_pad, Dp), x.dtype),
        grid_spec=pltpu.PrefetchScalarGridSpec(
            num_scalar_prefetch=0,
            grid=grid,
            in_specs=[
                pl.BlockSpec((tm, Dp), lambda i: (i, 0)),            # x rows
                pl.BlockSpec((L, Dp, 2 * Dp), lambda i: (0, 0, 0)),  # resident weights
                pl.BlockSpec((L, 1, 2 * Dp), lambda i: (0, 0, 0)),   # resident biases
            ],
            out_specs=pl.BlockSpec((tm, Dp), lambda i: (i, 0)),
        ),
        compiler_params=pltpu.CompilerParams(
            dimension_semantics=("parallel",),
            vmem_limit_bytes=vmem_limit),
        cost_estimate=cost,
    )(x2d, w_cat, b_cat)

    return out2d[:M, :D].reshape(B, S, D)


def highway_reference(x, wt, bt, wg, bg):
    """Pure-JAX reference matching the PyTorch module (f32 throughout)."""
    L = wt.shape[0]
    for l in range(L):
        h = jax.nn.relu(jnp.einsum('bsd,od->bso', x, wt[l]) + bt[l])
        t = jax.nn.sigmoid(jnp.einsum('bsd,od->bso', x, wg[l]) + bg[l])
        x = h * t + x * (1.0 - t)
    return x


if __name__ == "__main__":
    B, S, D, L = 2, 8, 32, 2   # batch, seq_len, hidden_dim, num_layers

    key = jax.random.PRNGKey(0)
    kx, kwt, kbt, kwg, kbg = jax.random.split(key, 5)

    # Deterministic init mimicking nn.Linear default: U(-1/sqrt(D), 1/sqrt(D)).
    bound = 1.0 / jnp.sqrt(jnp.float32(D))
    x = jax.random.normal(kx, (B, S, D), dtype=jnp.float32)
    wt = jax.random.uniform(kwt, (L, D, D), minval=-bound, maxval=bound,
                            dtype=jnp.float32)   # (out, in) PyTorch layout
    bt = jax.random.uniform(kbt, (L, D), minval=-bound, maxval=bound,
                            dtype=jnp.float32)
    wg = jax.random.uniform(kwg, (L, D, D), minval=-bound, maxval=bound,
                            dtype=jnp.float32)
    bg = jax.random.uniform(kbg, (L, D), minval=-bound, maxval=bound,
                            dtype=jnp.float32)

    ref = highway_reference(x, wt, bt, wg, bg)

    # --- Exact path (f32 weights, exact sigmoid): tight-tolerance check. ---
    w_cat, b_cat = prepare_highway_params(wt, bt, wg, bg, mxu_dtype=None)
    out = highway_forward(x, w_cat, b_cat, approx_sigmoid=False)
    out = jax.block_until_ready(out)
    assert out.shape == (B, S, D)
    assert jnp.allclose(out, ref, atol=1e-5, rtol=1e-5), "f32 mismatch vs reference"

    # --- Production path (bf16 weights / MXU inputs + EUP approx sigmoid). ---
    w_bf16, b_bf16 = prepare_highway_params(wt, bt, wg, bg,
                                            mxu_dtype=jnp.bfloat16)
    out_fast = highway_forward(x, w_bf16, b_bf16, approx_sigmoid=True)
    out_fast = jax.block_until_ready(out_fast)
    assert jnp.allclose(out_fast, ref, atol=5e-2, rtol=5e-2), \
        "bf16/approx mismatch vs reference (loose tolerance)"

    print("KERNEL_OK")
</pallas_src>

<mosaic_0001>
module attributes {stable_mosaic.version = 11 : i64} {
  func.func @highway_kernel(%arg0: i32, %arg1: memref<16x128xf32, #tpu.memory_space<vmem>>, %arg2: memref<2x128x256xf32, #tpu.memory_space<vmem>>, %arg3: memref<2x1x256xf32, #tpu.memory_space<vmem>>, %arg4: memref<16x128xf32, #tpu.memory_space<vmem>>) attributes {dimension_semantics = [#tpu.dimension_semantics<parallel>], iteration_bounds = array<i64: 1>, scalar_prefetch = 0 : i64, scratch_operands = 0 : i64, tpu.core_type = #tpu.core_type<tc>, window_params = [{transform_indices = @transform_0, window_bounds = array<i64: 16, 128>}, {pipeline_mode = #tpu.pipeline_mode<synchronous>, transform_indices = @transform_1, window_bounds = array<i64: 2, 128, 256>}, {pipeline_mode = #tpu.pipeline_mode<synchronous>, transform_indices = @transform_2, window_bounds = array<i64: 2, 1, 256>}, {transform_indices = @transform_3, window_bounds = array<i64: 16, 128>}]} {
    %c0 = arith.constant 0 : index
    %c0_0 = arith.constant 0 : index
    %0 = vector.load %arg1[%c0, %c0_0] : memref<16x128xf32, #tpu.memory_space<vmem>>, vector<16x128xf32>
    %c0_i32 = arith.constant 0 : i32
    %1 = arith.index_cast %c0_i32 : i32 to index
    %c0_1 = arith.constant 0 : index
    %c0_2 = arith.constant 0 : index
    %2 = vector.load %arg2[%1, %c0_1, %c0_2] : memref<2x128x256xf32, #tpu.memory_space<vmem>>, vector<1x128x256xf32>
    %3 = vector.shape_cast %2 : vector<1x128x256xf32> to vector<128x256xf32>
    %cst = arith.constant dense<0.000000e+00> : vector<16x256xf32>
    %4 = tpu.matmul %0, %3, %cst {dimension_numbers = #tpu.dot_dimension_numbers<[1], [0], [0], [1], [0, 0, 1, 1], [], []>} : vector<16x128xf32>, vector<128x256xf32>, vector<16x256xf32> -> vector<16x256xf32>
    %5 = arith.index_cast %c0_i32 : i32 to index
    %c0_3 = arith.constant 0 : index
    %c0_4 = arith.constant 0 : index
    %6 = vector.load %arg3[%5, %c0_3, %c0_4] : memref<2x1x256xf32, #tpu.memory_space<vmem>>, vector<1x1x256xf32>
    %7 = vector.shape_cast %6 : vector<1x1x256xf32> to vector<1x256xf32>
    %8 = vector.broadcast %7 : vector<1x256xf32> to vector<16x256xf32>
    %9 = arith.addf %4, %8 : vector<16x256xf32>
    %10 = vector.extract_strided_slice %9 {offsets = [0, 0], sizes = [16, 128], strides = [1, 1]} : vector<16x256xf32> to vector<16x128xf32>
    %cst_5 = arith.constant 0.000000e+00 : f32
    %11 = vector.broadcast %cst_5 : f32 to vector<16x128xf32>
    %12 = arith.maximumf %10, %11 : vector<16x128xf32>
    %13 = vector.extract_strided_slice %9 {offsets = [0, 128], sizes = [16, 128], strides = [1, 1]} : vector<16x256xf32> to vector<16x128xf32>
    %14 = arith.negf %13 : vector<16x128xf32>
    %15 = math.exp %14 : vector<16x128xf32>
    %cst_6 = arith.constant 1.000000e+00 : f32
    %16 = vector.broadcast %cst_6 : f32 to vector<16x128xf32>
    %17 = arith.addf %16, %15 : vector<16x128xf32>
    %18 = arith.divf %16, %17 : vector<16x128xf32>
    %19 = arith.subf %12, %0 : vector<16x128xf32>
    %20 = arith.mulf %18, %19 : vector<16x128xf32>
    %21 = arith.addf %0, %20 : vector<16x128xf32>
    %c1_i32 = arith.constant 1 : i32
    %22 = arith.index_cast %c1_i32 : i32 to index
    %c0_7 = arith.constant 0 : index
    %c0_8 = arith.constant 0 : index
    %23 = vector.load %arg2[%22, %c0_7, %c0_8] : memref<2x128x256xf32, #tpu.memory_space<vmem>>, vector<1x128x256xf32>
    %24 = vector.shape_cast %23 : vector<1x128x256xf32> to vector<128x256xf32>
    %cst_9 = arith.constant dense<0.000000e+00> : vector<16x256xf32>
    %25 = tpu.matmul %21, %24, %cst_9 {dimension_numbers = #tpu.dot_dimension_numbers<[1], [0], [0], [1], [0, 0, 1, 1], [], []>} : vector<16x128xf32>, vector<128x256xf32>, vector<16x256xf32> -> vector<16x256xf32>
    %26 = arith.index_cast %c1_i32 : i32 to index
    %c0_10 = arith.constant 0 : index
    %c0_11 = arith.constant 0 : index
    %27 = vector.load %arg3[%26, %c0_10, %c0_11] : memref<2x1x256xf32, #tpu.memory_space<vmem>>, vector<1x1x256xf32>
    %28 = vector.shape_cast %27 : vector<1x1x256xf32> to vector<1x256xf32>
    %29 = vector.broadcast %28 : vector<1x256xf32> to vector<16x256xf32>
    %30 = arith.addf %25, %29 : vector<16x256xf32>
    %31 = vector.extract_strided_slice %30 {offsets = [0, 0], sizes = [16, 128], strides = [1, 1]} : vector<16x256xf32> to vector<16x128xf32>
    %cst_12 = arith.constant 0.000000e+00 : f32
    %32 = vector.broadcast %cst_12 : f32 to vector<16x128xf32>
    %33 = arith.maximumf %31, %32 : vector<16x128xf32>
    %34 = vector.extract_strided_slice %30 {offsets = [0, 128], sizes = [16, 128], strides = [1, 1]} : vector<16x256xf32> to vector<16x128xf32>
    %35 = arith.negf %34 : vector<16x128xf32>
    %36 = math.exp %35 : vector<16x128xf32>
    %cst_13 = arith.constant 1.000000e+00 : f32
    %37 = vector.broadcast %cst_13 : f32 to vector<16x128xf32>
    %38 = arith.addf %37, %36 : vector<16x128xf32>
    %39 = arith.divf %37, %38 : vector<16x128xf32>
    %40 = arith.subf %33, %21 : vector<16x128xf32>
    %41 = arith.mulf %39, %40 : vector<16x128xf32>
    %42 = arith.addf %21, %41 : vector<16x128xf32>
    %c2_i32 = arith.constant 2 : i32
    %c0_14 = arith.constant 0 : index
    %c0_15 = arith.constant 0 : index
    %43 = vector.load %arg4[%c0_14, %c0_15] : memref<16x128xf32, #tpu.memory_space<vmem>>, vector<16x128xf32>
    tpu.vector_store %arg4[%c0_14, %c0_15], %42 {strides = array<i32>} : memref<16x128xf32, #tpu.memory_space<vmem>>, vector<16x128xf32>,
    return
  }
  func.func @transform_0(%arg0: i32) -> (i32, i32) {
    %c0_i32 = arith.constant 0 : i32
    %c0_i32_0 = arith.constant 0 : i32
    return %arg0, %c0_i32 : i32, i32
  }
  func.func @transform_1(%arg0: i32) -> (i32, i32, i32) {
    %c0_i32 = arith.constant 0 : i32
    %c0_i32_0 = arith.constant 0 : i32
    %c0_i32_1 = arith.constant 0 : i32
    %c0_i32_2 = arith.constant 0 : i32
    return %c0_i32, %c0_i32_0, %c0_i32_1 : i32, i32, i32
  }
  func.func @transform_2(%arg0: i32) -> (i32, i32, i32) {
    %c0_i32 = arith.constant 0 : i32
    %c0_i32_0 = arith.constant 0 : i32
    %c0_i32_1 = arith.constant 0 : i32
    %c0_i32_2 = arith.constant 0 : i32
    return %c0_i32, %c0_i32_0, %c0_i32_1 : i32, i32, i32
  }
  func.func @transform_3(%arg0: i32) -> (i32, i32) {
    %c0_i32 = arith.constant 0 : i32
    %c0_i32_0 = arith.constant 0 : i32
    return %arg0, %c0_i32 : i32, i32
  }
}

</mosaic_0001>

<llo_original>
// kernel: tpu_custom_call.1
$region0: #{tpu_custom_call.1}
  #allocation0 [shape = 'u32[]', space=smem, size = 0x4, offset = 0x4, fixed_abs, tag = 'smem constant byte address 0x4 - core index']
  #allocation1 [shape = 'u32[144,128]{1,0:T(1,128)}', space=vmem, size = 0x12000, scoped, tag = 'internal scratch']
  %s0 = inlined_call_operand.hbm [shape: f32[16,128], index: 0, kind: input, shape index: {}]
  %s1 = inlined_call_operand.hbm [shape: f32[2,128,256], index: 1, kind: input, shape index: {}]
  %s2 = inlined_call_operand.hbm [shape: f32[2,1,256], index: 2, kind: input, shape index: {}]
  %s3 = inlined_call_operand.hbm [shape: f32[16,128], index: 3, kind: output, shape index: {}]
  %s4 = sld [smem:[#allocation0]]
  $region34: #{tpu_custom_call.1} parent=0
    _
  %s6 = ssub.s32 1, %s4
  %s7 = scalar_select 0, %s6, %s4
  $region1: #{tpu_custom_call.1} parent=0
    #allocation2 [shape = 'u8[8192]{0}', space=vmem, size = 0x2000, scoped, tag = 'input window, operand 0, single buffered']
    #allocation3 [shape = 's32[1]{0}', space=sflag, size = 0x4, scoped, tag = 'scoped memory for tpu_custom_call.1']
    #allocation4 [shape = 's32[1]{0}', space=sflag, size = 0x4, scoped, tag = 'scoped memory for tpu_custom_call.1']
    #allocation5 [shape = 'u8[262144]{0}', space=vmem, size = 0x40000, scoped, tag = 'input window, operand 1, single buffered']
    #allocation6 [shape = 's32[1]{0}', space=sflag, size = 0x4, scoped, tag = 'scoped memory for tpu_custom_call.1']
    #allocation7 [shape = 'u8[2048]{0}', space=vmem, size = 0x800, scoped, tag = 'input window, operand 2, single buffered']
    #allocation8 [shape = 'u8[8192]{0}', space=vmem, size = 0x2000, scoped, tag = 'output window, operand 0, single buffered']
    %8 = vsyncpa [#allocation3], 0
    %9 = vsyncpa [#allocation6], 0
    %10 = vsyncpa [#allocation4], 0
    // Predicated region
    $region2: #{tpu_custom_call.1} parent=1 // pred_check
      _
    $region3: #{tpu_custom_call.1} parent=1 // pred_check_branch
      %12 = sbr.rel (0) target = $region5
    $region4: #{tpu_custom_call.1} parent=1 // pred_region
      %s14 = ssub.s32 256, 256
      %15 = vsyncadd [#allocation3], %s14
      %s16 = sshll.u32 [#allocation2], 4
      %s17 = int_to_ptr.vmem [resolvable:$true] %s16
      %22 = dma.hbm_to_vmem [thread:$0]  %s0, 256, %s17, [#allocation3], 128, 128, 8
    $region5: #{tpu_custom_call.1} parent=1 // pred_fallthru
      _
    // Predicated region
    $region6: #{tpu_custom_call.1} parent=1 // pred_check
      _
    $region7: #{tpu_custom_call.1} parent=1 // pred_check_branch
      %24 = sbr.rel (0) target = $region9
    $region8: #{tpu_custom_call.1} parent=1 // pred_region
      %s26 = ssub.s32 8192, 8192
      %27 = vsyncadd [#allocation6], %s26
      %s28 = sshll.u32 [#allocation5], 4
      %s29 = int_to_ptr.vmem [resolvable:$true] %s28
      %34 = dma.hbm_to_vmem [thread:$0]  %s1, 8192, %s29, [#allocation6], 256, 256, 16
    $region9: #{tpu_custom_call.1} parent=1 // pred_fallthru
      _
    // Predicated region
    $region10: #{tpu_custom_call.1} parent=1 // pred_check
      _
    $region11: #{tpu_custom_call.1} parent=1 // pred_check_branch
      %36 = sbr.rel (0) target = $region13
    $region12: #{tpu_custom_call.1} parent=1 // pred_region
      %s38 = ssub.s32 64, 64
      %39 = vsyncadd [#allocation6], %s38
      %s40 = sshll.u32 [#allocation7], 4
      %s41 = int_to_ptr.vmem [resolvable:$true] %s40
      %46 = dma.hbm_to_vmem [thread:$0]  %s2, 64, %s41, [#allocation6], 32, 32, 2
    $region13: #{tpu_custom_call.1} parent=1 // pred_fallthru
      _
    // Predicated region
    $region14: #{tpu_custom_call.1} parent=1 // pred_check
      _
    $region15: #{tpu_custom_call.1} parent=1 // pred_check_branch
      %48 = sbr.rel (0) target = $region17
    $region16: #{tpu_custom_call.1} parent=1 // pred_region
      %49 = dma.done [#allocation3], 256
    $region17: #{tpu_custom_call.1} parent=1 // pred_fallthru
      _
    // Predicated region
    $region18: #{tpu_custom_call.1} parent=1 // pred_check
      _
    $region19: #{tpu_custom_call.1} parent=1 // pred_check_branch
      %51 = sbr.rel (0) target = $region21
    $region20: #{tpu_custom_call.1} parent=1 // pred_region
      %52 = dma.done [#allocation6], 8192
    $region21: #{tpu_custom_call.1} parent=1 // pred_fallthru
      _
    // Predicated region
    $region22: #{tpu_custom_call.1} parent=1 // pred_check
      _
    $region23: #{tpu_custom_call.1} parent=1 // pred_check_branch
      %54 = sbr.rel (0) target = $region25
    $region24: #{tpu_custom_call.1} parent=1 // pred_region
      %55 = dma.done [#allocation6], 64
    $region25: #{tpu_custom_call.1} parent=1 // pred_fallthru
      _
    %v56 = vld [vmem:[#allocation2] sm:$0xff]
    %v57 = vld [vmem:[#allocation2 + $0x8] sm:$0xff]
    %v58 = vld [vmem:[#allocation5] sm:$0xff]
    %v59 = vld [vmem:[#allocation5 + $0x8] sm:$0xff]
    %v60 = vld [vmem:[#allocation5 + $0x10] sm:$0xff]
    %v61 = vld [vmem:[#allocation5 + $0x18] sm:$0xff]
    %v62 = vld [vmem:[#allocation5 + $0x20] sm:$0xff]
    %v63 = vld [vmem:[#allocation5 + $0x28] sm:$0xff]
    %v64 = vld [vmem:[#allocation5 + $0x30] sm:$0xff]
    %v65 = vld [vmem:[#allocation5 + $0x38] sm:$0xff]
    %v66 = vld [vmem:[#allocation5 + $0x40] sm:$0xff]
    %v67 = vld [vmem:[#allocation5 + $0x48] sm:$0xff]
    %v68 = vld [vmem:[#allocation5 + $0x50] sm:$0xff]
    %v69 = vld [vmem:[#allocation5 + $0x58] sm:$0xff]
    %v70 = vld [vmem:[#allocation5 + $0x60] sm:$0xff]
    %v71 = vld [vmem:[#allocation5 + $0x68] sm:$0xff]
    %v72 = vld [vmem:[#allocation5 + $0x70] sm:$0xff]
    %v73 = vld [vmem:[#allocation5 + $0x78] sm:$0xff]
    %v74 = vld [vmem:[#allocation5 + $0x80] sm:$0xff]
    %v75 = vld [vmem:[#allocation5 + $0x88] sm:$0xff]
    %v76 = vld [vmem:[#allocation5 + $0x90] sm:$0xff]
    %v77 = vld [vmem:[#allocation5 + $0x98] sm:$0xff]
    %v78 = vld [vmem:[#allocation5 + $0xa0] sm:$0xff]
    %v79 = vld [vmem:[#allocation5 + $0xa8] sm:$0xff]
    %v80 = vld [vmem:[#allocation5 + $0xb0] sm:$0xff]
    %v81 = vld [vmem:[#allocation5 + $0xb8] sm:$0xff]
    %v82 = vld [vmem:[#allocation5 + $0xc0] sm:$0xff]
    %v83 = vld [vmem:[#allocation5 + $0xc8] sm:$0xff]
    %v84 = vld [vmem:[#allocation5 + $0xd0] sm:$0xff]
    %v85 = vld [vmem:[#allocation5 + $0xd8] sm:$0xff]
    %v86 = vld [vmem:[#allocation5 + $0xe0] sm:$0xff]
    %v87 = vld [vmem:[#allocation5 + $0xe8] sm:$0xff]
    %v88 = vld [vmem:[#allocation5 + $0xf0] sm:$0xff]
    %v89 = vld [vmem:[#allocation5 + $0xf8] sm:$0xff]
    %v90 = vld [vmem:[#allocation7] sm:$0x3]
    %v92 = vlaneseq
    %v93 = vshrl.u32 %v92, 7
    %v94 = vsub.s32 0, %v93
    %v95 = vrot.slane %v90, %v94
    %v96 = vlaneseq
    %v97 = vshrl.u32 %v96, 7
    %v98 = vsub.s32 1, %v97
    %v99 = vrot.slane %v90, %v98
    %102 = vmatprep.subr.mxu0 %v89
    %103 = vmatpush1.msra.mxu0 %v88
    %104 = vmatprep.subr.mxu0 %v87
    %105 = vmatpush1.msra.mxu0 %v86
    %106 = vmatprep.subr.mxu0 %v85
    %107 = vmatpush1.msra.mxu0 %v84
    %108 = vmatprep.subr.mxu0 %v83
    %109 = vmatpush1.msra.mxu0 %v82
    %110 = vmatprep.subr.mxu0 %v81
    %111 = vmatpush1.msra.mxu0 %v80
    %112 = vmatprep.subr.mxu0 %v79
    %113 = vmatpush1.msra.mxu0 %v78
    %114 = vmatprep.subr.mxu0 %v77
    %115 = vmatpush1.msra.mxu0 %v76
    %116 = vmatprep.subr.mxu0 %v75
    %117 = vmatpush1.msra.mxu0 %v74
    %118 = vmatprep.subr.mxu0 %v73
    %119 = vmatpush1.msra.mxu0 %v72
    %120 = vmatprep.subr.mxu0 %v71
    %121 = vmatpush1.msra.mxu0 %v70
    %122 = vmatprep.subr.mxu0 %v69
    %123 = vmatpush1.msra.mxu0 %v68
    %124 = vmatprep.subr.mxu0 %v67
    %125 = vmatpush1.msra.mxu0 %v66
    %126 = vmatprep.subr.mxu0 %v65
    %127 = vmatpush1.msra.mxu0 %v64
    %128 = vmatprep.subr.mxu0 %v63
    %129 = vmatpush1.msra.mxu0 %v62
    %130 = vmatprep.subr.mxu0 %v61
    %131 = vmatpush1.msra.mxu0 %v60
    %132 = vmatprep.subr.mxu0 %v59
    %133 = vmatpush1.msra.mxu0 %v58
    %134 = vmatprep.subr.mxu0 0.0
    %135 = vmatpush2.msra.mxu0 0.0
    %136 = vmatprep.subr.mxu0 0.0
    %137 = vmatpush2.msra.mxu0 0.0
    %138 = vmatprep.subr.mxu0 0.0
    %139 = vmatpush2.msra.mxu0 0.0
    %140 = vmatprep.subr.mxu0 0.0
    %141 = vmatpush2.msra.mxu0 0.0
    %142 = vmatprep.subr.mxu0 0.0
    %143 = vmatpush2.msra.mxu0 0.0
    %144 = vmatprep.subr.mxu0 0.0
    %145 = vmatpush2.msra.mxu0 0.0
    %146 = vmatprep.subr.mxu0 0.0
    %147 = vmatpush2.msra.mxu0 0.0
    %148 = vmatprep.subr.mxu0 0.0
    %149 = vmatpush2.msra.mxu0 0.0
    %150 = vmatprep.subr.mxu0 0.0
    %151 = vmatpush2.msra.mxu0 0.0
    %152 = vmatprep.subr.mxu0 0.0
    %153 = vmatpush2.msra.mxu0 0.0
    %154 = vmatprep.subr.mxu0 0.0
    %155 = vmatpush2.msra.mxu0 0.0
    %156 = vmatprep.subr.mxu0 0.0
    %157 = vmatpush2.msra.mxu0 0.0
    %158 = vmatprep.subr.mxu0 0.0
    %159 = vmatpush2.msra.mxu0 0.0
    %160 = vmatprep.subr.mxu0 0.0
    %161 = vmatpush2.msra.mxu0 0.0
    %162 = vmatprep.subr.mxu0 0.0
    %163 = vmatpush2.msra.mxu0 0.0
    %164 = vmatprep.subr.mxu0 0.0
    %165 = vmatpush2.msra.mxu0 0.0
    %166 = vmatprep.mubr.f32.mxu0 0.0
    %167 = vmatmul.mubr.f32.gmra.mxu0 %v56
    %v168 = vpop.f32.mrf.mxu0
    %v169 = vadd.f32 %v95, %v168
    %v170 = vpop.f32.mrf.mxu0
    %v171 = vadd.f32 %v99, %v170
    %172 = vmatprep.mubr.f32.mxu0 0.0
    %173 = vmatmul.mubr.f32.gmra.mxu0 %v57
    %v174 = vpop.f32.mrf.mxu0
    %v175 = vadd.f32 %v95, %v174
    %v176 = vpop.f32.mrf.mxu0
    %v177 = vadd.f32 %v99, %v176
    %178 = vdwg.mxu0
    %v179 = vmax.f32 %v169, 0.0
    %v180 = vmax.f32 %v175, 0.0
    %v181 = vxor.u32 %v171, 2147483648
    %v182 = vxor.u32 %v177, 2147483648
    %v183 = vmul.f32 %v181, 1.442695
    %v184 = vpow.pop %v183
    %v185 = vmul.f32 %v182, 1.442695
    %v186 = vpow.pop %v185
    %v187 = vadd.f32 %v184, 1.0
    %v188 = vadd.f32 %v186, 1.0
    %v189 = vrcp.pop %v187
    %v190 = vmul.f32 1.0, %v189
    %v191 = vrcp.pop %v188
    %v192 = vmul.f32 1.0, %v191
    %v193 = vsub.f32 %v179, %v56
    %v194 = vsub.f32 %v180, %v57
    %v195 = vmul.f32 %v190, %v193
    %v196 = vmul.f32 %v192, %v194
    %v197 = vadd.f32 %v56, %v195
    %v198 = vadd.f32 %v57, %v196
    %s199 = scalar_lea.vmem [#allocation5], 256
    %v200 = vld [vmem:[%s199] sm:$0xff]
    %v201 = vld [vmem:[%s199 + $0x8] sm:$0xff]
    %v202 = vld [vmem:[%s199 + $0x10] sm:$0xff]
    %v203 = vld [vmem:[%s199 + $0x18] sm:$0xff]
    %v204 = vld [vmem:[%s199 + $0x20] sm:$0xff]
    %v205 = vld [vmem:[%s199 + $0x28] sm:$0xff]
    %v206 = vld [vmem:[%s199 + $0x30] sm:$0xff]
    %v207 = vld [vmem:[%s199 + $0x38] sm:$0xff]
    %v208 = vld [vmem:[%s199 + $0x40] sm:$0xff]
    %v209 = vld [vmem:[%s199 + $0x48] sm:$0xff]
    %v210 = vld [vmem:[%s199 + $0x50] sm:$0xff]
    %v211 = vld [vmem:[%s199 + $0x58] sm:$0xff]
    %v212 = vld [vmem:[%s199 + $0x60] sm:$0xff]
    %v213 = vld [vmem:[%s199 + $0x68] sm:$0xff]
    %v214 = vld [vmem:[%s199 + $0x70] sm:$0xff]
    %v215 = vld [vmem:[%s199 + $0x78] sm:$0xff]
    %v216 = vld [vmem:[%s199 + $0x80] sm:$0xff]
    %v217 = vld [vmem:[%s199 + $0x88] sm:$0xff]
    %v218 = vld [vmem:[%s199 + $0x90] sm:$0xff]
    %v219 = vld [vmem:[%s199 + $0x98] sm:$0xff]
    %v220 = vld [vmem:[%s199 + $0xa0] sm:$0xff]
    %v221 = vld [vmem:[%s199 + $0xa8] sm:$0xff]
    %v222 = vld [vmem:[%s199 + $0xb0] sm:$0xff]
    %v223 = vld [vmem:[%s199 + $0xb8] sm:$0xff]
    %v224 = vld [vmem:[%s199 + $0xc0] sm:$0xff]
    %v225 = vld [vmem:[%s199 + $0xc8] sm:$0xff]
    %v226 = vld [vmem:[%s199 + $0xd0] sm:$0xff]
    %v227 = vld [vmem:[%s199 + $0xd8] sm:$0xff]
    %v228 = vld [vmem:[%s199 + $0xe0] sm:$0xff]
    %v229 = vld [vmem:[%s199 + $0xe8] sm:$0xff]
    %v230 = vld [vmem:[%s199 + $0xf0] sm:$0xff]
    %v231 = vld [vmem:[%s199 + $0xf8] sm:$0xff]
    %s232 = scalar_lea.vmem [#allocation7], 2
    %v233 = vld [vmem:[%s232] sm:$0x3]
    %v235 = vlaneseq
    %v236 = vshrl.u32 %v235, 7
    %v237 = vsub.s32 0, %v236
    %v238 = vrot.slane %v233, %v237
    %v239 = vlaneseq
    %v240 = vshrl.u32 %v239, 7
    %v241 = vsub.s32 1, %v240
    %v242 = vrot.slane %v233, %v241
    %245 = vmatprep.subr.mxu0 %v231
    %246 = vmatpush1.msra.mxu0 %v230
    %247 = vmatprep.subr.mxu0 %v229
    %248 = vmatpush1.msra.mxu0 %v228
    %249 = vmatprep.subr.mxu0 %v227
    %250 = vmatpush1.msra.mxu0 %v226
    %251 = vmatprep.subr.mxu0 %v225
    %252 = vmatpush1.msra.mxu0 %v224
    %253 = vmatprep.subr.mxu0 %v223
    %254 = vmatpush1.msra.mxu0 %v222
    %255 = vmatprep.subr.mxu0 %v221
    %256 = vmatpush1.msra.mxu0 %v220
    %257 = vmatprep.subr.mxu0 %v219
    %258 = vmatpush1.msra.mxu0 %v218
    %259 = vmatprep.subr.mxu0 %v217
    %260 = vmatpush1.msra.mxu0 %v216
    %261 = vmatprep.subr.mxu0 %v215
    %262 = vmatpush1.msra.mxu0 %v214
    %263 = vmatprep.subr.mxu0 %v213
    %264 = vmatpush1.msra.mxu0 %v212
    %265 = vmatprep.subr.mxu0 %v211
    %266 = vmatpush1.msra.mxu0 %v210
    %267 = vmatprep.subr.mxu0 %v209
    %268 = vmatpush1.msra.mxu0 %v208
    %269 = vmatprep.subr.mxu0 %v207
    %270 = vmatpush1.msra.mxu0 %v206
    %271 = vmatprep.subr.mxu0 %v205
    %272 = vmatpush1.msra.mxu0 %v204
    %273 = vmatprep.subr.mxu0 %v203
    %274 = vmatpush1.msra.mxu0 %v202
    %275 = vmatprep.subr.mxu0 %v201
    %276 = vmatpush1.msra.mxu0 %v200
    %277 = vmatprep.subr.mxu0 0.0
    %278 = vmatpush2.msra.mxu0 0.0
    %279 = vmatprep.subr.mxu0 0.0
    %280 = vmatpush2.msra.mxu0 0.0
    %281 = vmatprep.subr.mxu0 0.0
    %282 = vmatpush2.msra.mxu0 0.0
    %283 = vmatprep.subr.mxu0 0.0
    %284 = vmatpush2.msra.mxu0 0.0
    %285 = vmatprep.subr.mxu0 0.0
    %286 = vmatpush2.msra.mxu0 0.0
    %287 = vmatprep.subr.mxu0 0.0
    %288 = vmatpush2.msra.mxu0 0.0
    %289 = vmatprep.subr.mxu0 0.0
    %290 = vmatpush2.msra.mxu0 0.0
    %291 = vmatprep.subr.mxu0 0.0
    %292 = vmatpush2.msra.mxu0 0.0
    %293 = vmatprep.subr.mxu0 0.0
    %294 = vmatpush2.msra.mxu0 0.0
    %295 = vmatprep.subr.mxu0 0.0
    %296 = vmatpush2.msra.mxu0 0.0
    %297 = vmatprep.subr.mxu0 0.0
    %298 = vmatpush2.msra.mxu0 0.0
    %299 = vmatprep.subr.mxu0 0.0
    %300 = vmatpush2.msra.mxu0 0.0
    %301 = vmatprep.subr.mxu0 0.0
    %302 = vmatpush2.msra.mxu0 0.0
    %303 = vmatprep.subr.mxu0 0.0
    %304 = vmatpush2.msra.mxu0 0.0
    %305 = vmatprep.subr.mxu0 0.0
    %306 = vmatpush2.msra.mxu0 0.0
    %307 = vmatprep.subr.mxu0 0.0
    %308 = vmatpush2.msra.mxu0 0.0
    %309 = vmatprep.mubr.f32.mxu0 0.0
    %310 = vmatmul.mubr.f32.gmra.mxu0 %v197
    %v311 = vpop.f32.mrf.mxu0
    %v312 = vadd.f32 %v238, %v311
    %v313 = vpop.f32.mrf.mxu0
    %v314 = vadd.f32 %v242, %v313
    %315 = vmatprep.mubr.f32.mxu0 0.0
    %316 = vmatmul.mubr.f32.gmra.mxu0 %v198
    %v317 = vpop.f32.mrf.mxu0
    %v318 = vadd.f32 %v238, %v317
    %v319 = vpop.f32.mrf.mxu0
    %v320 = vadd.f32 %v242, %v319
    %321 = vdwg.mxu0
    %v322 = vmax.f32 %v312, 0.0
    %v323 = vmax.f32 %v318, 0.0
    %v324 = vxor.u32 %v314, 2147483648
    %v325 = vxor.u32 %v320, 2147483648
    %v326 = vmul.f32 %v324, 1.442695
    %v327 = vpow.pop %v326
    %v328 = vmul.f32 %v325, 1.442695
    %v329 = vpow.pop %v328
    %v330 = vadd.f32 %v327, 1.0
    %v331 = vadd.f32 %v329, 1.0
    %v332 = vrcp.pop %v330
    %v333 = vmul.f32 1.0, %v332
    %v334 = vrcp.pop %v331
    %v335 = vmul.f32 1.0, %v334
    %v336 = vsub.f32 %v322, %v197
    %v337 = vsub.f32 %v323, %v198
    %v338 = vmul.f32 %v333, %v336
    %v339 = vmul.f32 %v335, %v337
    %v340 = vadd.f32 %v197, %v338
    %v341 = vadd.f32 %v198, %v339
    %342 = vst [vmem:[#allocation8] sm:$0xff] %v340
    %343 = vst [vmem:[#allocation8 + $0x8] sm:$0xff] %v341
    // Predicated region
    $region26: #{tpu_custom_call.1} parent=1 // pred_check
      _
    $region27: #{tpu_custom_call.1} parent=1 // pred_check_branch
      %345 = sbr.rel (0) target = $region29
    $region28: #{tpu_custom_call.1} parent=1 // pred_region
      %s347 = ssub.s32 256, 256
      %348 = vsyncadd [#allocation4], %s347
      %s349 = sshll.u32 [#allocation8], 4
      %s350 = int_to_ptr.vmem [resolvable:$true] %s349
      %355 = dma.vmem_to_hbm [thread:$0]  %s350, 256, %s3, [#allocation4], 128, 128, 8
    $region29: #{tpu_custom_call.1} parent=1 // pred_fallthru
      _
    // Predicated region
    $region30: #{tpu_custom_call.1} parent=1 // pred_check
      _
    $region31: #{tpu_custom_call.1} parent=1 // pred_check_branch
      %357 = sbr.rel (0) target = $region33
    $region32: #{tpu_custom_call.1} parent=1 // pred_region
      %358 = dma.done [#allocation4], 256
    $region33: #{tpu_custom_call.1} parent=1 // pred_fallthru
      _
    %359 = vsyncpa [#allocation3], 1
    %360 = vsyncpa [#allocation6], 1
    %361 = vsyncpa [#allocation4], 1

</llo_original>
